<compile_context>
chip_gen: v6e
topology: v6e:2x2x1
jax: 0.10.0
libtpu: 0.0.40
codegen_flags: <defaults>
</compile_context>

<pallas_src>
from functools import partial

import jax
import jax.numpy as jnp
from jax.experimental import pallas as pl
from jax.experimental.pallas import tpu as pltpu


def _tpe_kernel(x_ref, pos_ref, o_ref, *, batch, dim):
    # x_ref: (Tt, B*D)   pos_ref: (Tt, D)   o_ref: (Tt, B*D)
    p = pos_ref[...]
    for b in range(batch):                        # static unroll: one lane-slice per batch element
        lo, hi = b * dim, (b + 1) * dim
        v = x_ref[:, lo:hi] + p                   # broadcast pos over the batch axis
        q = jnp.round(jnp.clip(v, 0.0, 4.0))      # MultiSpike: round(clamp(., 0, 4)); jnp.round == torch.round
        o_ref[:, lo:hi] = (q * 0.25).astype(o_ref.dtype)   # / Norm (Norm = max_value = 4)


def _choose_tt(T, row_bytes, target_tile_bytes):
    """Pick the timestep block size (second-to-last block dim => multiple of 8 or == T)."""
    total_bytes = T * row_bytes
    if total_bytes <= (2 << 20):
        return T                                   # tiny problem: one grid step, whole array
    tt = max(8, int(target_tile_bytes // max(row_bytes, 1)))
    tt = (tt // 8) * 8
    # keep >= 2 grid steps so v7x can shard the grid across its two TensorCores
    half = (((T + 1) // 2) + 7) // 8 * 8
    tt = min(tt, max(8, half))
    if tt >= T:
        return T
    return int(tt)


def temporal_position_encoder(x, pos_emb, *, out_dtype=None, target_tile_bytes=4 << 20):
    """x: (T, B, D) float32; pos_emb: (max_len, 1, D) float32.

    Returns round(clamp(x + pos_emb[:T], 0, 4)) / 4, shape (T, B, D), dtype
    out_dtype (default: x.dtype; bf16 is exact for the quantized values).
    """
    T, B, D = x.shape
    out_dtype = x.dtype if out_dtype is None else jnp.dtype(out_dtype)

    xf = x.reshape(T, B * D)                       # free reshape (merge trailing dims)
    posf = pos_emb[:T].reshape(T, D)               # (T, D)

    row_bytes = B * D * x.dtype.itemsize
    tt = _choose_tt(T, row_bytes, target_tile_bytes)
    grid = (pl.cdiv(T, tt),)

    out_itemsize = jnp.dtype(out_dtype).itemsize
    # double-buffered input/pos/output tiles + headroom; explicit so v5e's 16 MiB
    # default doesn't bite, capped below v7x's 64 MiB physical VMEM.
    tile_bytes = tt * (B * D * x.dtype.itemsize + D * posf.dtype.itemsize + B * D * out_itemsize)
    vmem_limit = int(min(max(2 * tile_bytes + (4 << 20), 32 << 20), 48 << 20))

    out2 = pl.pallas_call(
        partial(_tpe_kernel, batch=B, dim=D),
        out_shape=jax.ShapeDtypeStruct((T, B * D), out_dtype),
        grid_spec=pltpu.PrefetchScalarGridSpec(
            num_scalar_prefetch=0,
            grid=grid,
            in_specs=[
                pl.BlockSpec((tt, B * D), lambda t: (t, 0)),   # x tile
                pl.BlockSpec((tt, D), lambda t: (t, 0)),       # pos tile (rides the same T index)
            ],
            out_specs=pl.BlockSpec((tt, B * D), lambda t: (t, 0)),
        ),
        compiler_params=pltpu.CompilerParams(
            dimension_semantics=("parallel",),
            vmem_limit_bytes=vmem_limit,
        ),
    )(xf, posf)

    return out2.reshape(T, B, D)


if __name__ == "__main__":
    # Small shapes consistent with the module's forward: x is (T, B, embed_dim).
    T, B, D = 8, 2, 32
    max_len = 512

    key = jax.random.PRNGKey(0)
    kx, kp = jax.random.split(key)
    x = jax.random.normal(kx, (T, B, D), dtype=jnp.float32) * 2.0
    pos_emb = jax.random.normal(kp, (max_len, 1, D), dtype=jnp.float32)

    # Pure-JAX reference of the same math.
    ref = jnp.round(jnp.clip(x + pos_emb[:T], 0.0, 4.0)) / 4.0

    # Default (f32) output — matches the PyTorch module's dtype semantics.
    out = jax.block_until_ready(temporal_position_encoder(x, pos_emb))
    assert out.shape == (T, B, D) and out.dtype == x.dtype
    assert jnp.allclose(out, ref, atol=1e-6), "f32 mismatch vs reference"

    # bf16 output variant (per perf feedback): quantized values {0,.25,.5,.75,1}
    # are exact in bf16, so this is lossless while halving the HBM write stream.
    out_bf16 = jax.block_until_ready(
        temporal_position_encoder(x, pos_emb, out_dtype=jnp.bfloat16))
    assert out_bf16.dtype == jnp.bfloat16
    assert jnp.allclose(out_bf16.astype(jnp.float32), ref, atol=1e-6), "bf16 mismatch vs reference"

    # TODO(synk): Quant's custom backward (straight-through estimator) is not part of the
    # forward pass and is not implemented here.

    print("KERNEL_OK")
</pallas_src>

<mosaic_0001>
module attributes {stable_mosaic.version = 11 : i64} {
  func.func @_tpe_kernel(%arg0: i32, %arg1: memref<8x64xf32, #tpu.memory_space<vmem>>, %arg2: memref<8x32xf32, #tpu.memory_space<vmem>>, %arg3: memref<8x64xf32, #tpu.memory_space<vmem>>) attributes {dimension_semantics = [#tpu.dimension_semantics<parallel>], iteration_bounds = array<i64: 1>, scalar_prefetch = 0 : i64, scratch_operands = 0 : i64, tpu.core_type = #tpu.core_type<tc>, window_params = [{transform_indices = @transform_0, window_bounds = array<i64: 8, 64>}, {transform_indices = @transform_1, window_bounds = array<i64: 8, 32>}, {transform_indices = @transform_2, window_bounds = array<i64: 8, 64>}]} {
    %c0 = arith.constant 0 : index
    %c0_0 = arith.constant 0 : index
    %0 = vector.load %arg2[%c0, %c0_0] : memref<8x32xf32, #tpu.memory_space<vmem>>, vector<8x32xf32>
    %c0_1 = arith.constant 0 : index
    %c0_2 = arith.constant 0 : index
    %1 = vector.load %arg1[%c0_1, %c0_2] : memref<8x64xf32, #tpu.memory_space<vmem>>, vector<8x32xf32>
    %2 = arith.addf %1, %0 : vector<8x32xf32>
    %cst = arith.constant 0.000000e+00 : f32
    %cst_3 = arith.constant 4.000000e+00 : f32
    %3 = vector.broadcast %cst : f32 to vector<8x32xf32>
    %4 = arith.maximumf %3, %2 : vector<8x32xf32>
    %5 = vector.broadcast %cst_3 : f32 to vector<8x32xf32>
    %6 = arith.minimumf %5, %4 : vector<8x32xf32>
    %7 = math.roundeven %6 : vector<8x32xf32>
    %cst_4 = arith.constant 2.500000e-01 : f32
    %8 = vector.broadcast %cst_4 : f32 to vector<8x32xf32>
    %9 = arith.mulf %7, %8 : vector<8x32xf32>
    %c0_5 = arith.constant 0 : index
    %c0_6 = arith.constant 0 : index
    %10 = vector.load %arg3[%c0_5, %c0_6] : memref<8x64xf32, #tpu.memory_space<vmem>>, vector<8x32xf32>
    tpu.vector_store %arg3[%c0_5, %c0_6], %9 {strides = array<i32>} : memref<8x64xf32, #tpu.memory_space<vmem>>, vector<8x32xf32>,
    %c0_7 = arith.constant 0 : index
    %c32 = arith.constant 32 : index
    %11 = vector.load %arg1[%c0_7, %c32] : memref<8x64xf32, #tpu.memory_space<vmem>>, vector<8x32xf32>
    %12 = arith.addf %11, %0 : vector<8x32xf32>
    %cst_8 = arith.constant 0.000000e+00 : f32
    %cst_9 = arith.constant 4.000000e+00 : f32
    %13 = vector.broadcast %cst_8 : f32 to vector<8x32xf32>
    %14 = arith.maximumf %13, %12 : vector<8x32xf32>
    %15 = vector.broadcast %cst_9 : f32 to vector<8x32xf32>
    %16 = arith.minimumf %15, %14 : vector<8x32xf32>
    %17 = math.roundeven %16 : vector<8x32xf32>
    %cst_10 = arith.constant 2.500000e-01 : f32
    %18 = vector.broadcast %cst_10 : f32 to vector<8x32xf32>
    %19 = arith.mulf %17, %18 : vector<8x32xf32>
    %c0_11 = arith.constant 0 : index
    %c32_12 = arith.constant 32 : index
    %20 = vector.load %arg3[%c0_11, %c32_12] : memref<8x64xf32, #tpu.memory_space<vmem>>, vector<8x32xf32>
    tpu.vector_store %arg3[%c0_11, %c32_12], %19 {strides = array<i32>} : memref<8x64xf32, #tpu.memory_space<vmem>>, vector<8x32xf32>,
    return
  }
  func.func @transform_0(%arg0: i32) -> (i32, i32) {
    %c0_i32 = arith.constant 0 : i32
    %c0_i32_0 = arith.constant 0 : i32
    return %arg0, %c0_i32 : i32, i32
  }
  func.func @transform_1(%arg0: i32) -> (i32, i32) {
    %c0_i32 = arith.constant 0 : i32
    %c0_i32_0 = arith.constant 0 : i32
    return %arg0, %c0_i32 : i32, i32
  }
  func.func @transform_2(%arg0: i32) -> (i32, i32) {
    %c0_i32 = arith.constant 0 : i32
    %c0_i32_0 = arith.constant 0 : i32
    return %arg0, %c0_i32 : i32, i32
  }
}

</mosaic_0001>

<llo_original>
// kernel: tpu_custom_call.1
$region0: #{tpu_custom_call.1}
  #allocation0 [shape = 'u32[]', space=smem, size = 0x4, offset = 0x4, fixed_abs, tag = 'smem constant byte address 0x4 - core index']
  #allocation1 [shape = 'u32[144,128]{1,0:T(1,128)}', space=vmem, size = 0x12000, scoped, tag = 'internal scratch']
  %s0 = inlined_call_operand.hbm [shape: f32[8,64], index: 0, kind: input, shape index: {}]
  %s1 = inlined_call_operand.hbm [shape: f32[8,32], index: 1, kind: input, shape index: {}]
  %s2 = inlined_call_operand.hbm [shape: f32[8,64], index: 2, kind: output, shape index: {}]
  %s3 = sld [smem:[#allocation0]]
  $region26: #{tpu_custom_call.1} parent=0
    _
  %s5 = ssub.s32 1, %s3
  %s6 = scalar_select 0, %s5, %s3
  $region1: #{tpu_custom_call.1} parent=0
    #allocation2 [shape = 'u8[4096]{0}', space=vmem, size = 0x1000, scoped, tag = 'input window, operand 0, single buffered']
    #allocation3 [shape = 's32[1]{0}', space=sflag, size = 0x4, scoped, tag = 'scoped memory for tpu_custom_call.1']
    #allocation4 [shape = 's32[1]{0}', space=sflag, size = 0x4, scoped, tag = 'scoped memory for tpu_custom_call.1']
    #allocation5 [shape = 'u8[4096]{0}', space=vmem, size = 0x1000, scoped, tag = 'input window, operand 1, single buffered']
    #allocation6 [shape = 's32[1]{0}', space=sflag, size = 0x4, scoped, tag = 'scoped memory for tpu_custom_call.1']
    #allocation7 [shape = 'u8[4096]{0}', space=vmem, size = 0x1000, scoped, tag = 'output window, operand 0, single buffered']
    %7 = vsyncpa [#allocation3], 0
    %8 = vsyncpa [#allocation6], 0
    %9 = vsyncpa [#allocation4], 0
    // Predicated region
    $region2: #{tpu_custom_call.1} parent=1 // pred_check
      _
    $region3: #{tpu_custom_call.1} parent=1 // pred_check_branch
      %11 = sbr.rel (0) target = $region5
    $region4: #{tpu_custom_call.1} parent=1 // pred_region
      %s13 = ssub.s32 128, 128
      %14 = vsyncadd [#allocation3], %s13
      %s16 = sshll.u32 [#allocation2], 4
      %s17 = int_to_ptr.vmem [resolvable:$true] %s16
      %19 = dma.hbm_to_vmem [thread:$0]  %s0, 128, %s17, [#allocation3]
    $region5: #{tpu_custom_call.1} parent=1 // pred_fallthru
      _
    // Predicated region
    $region6: #{tpu_custom_call.1} parent=1 // pred_check
      _
    $region7: #{tpu_custom_call.1} parent=1 // pred_check_branch
      %21 = sbr.rel (0) target = $region9
    $region8: #{tpu_custom_call.1} parent=1 // pred_region
      %s23 = ssub.s32 128, 128
      %24 = vsyncadd [#allocation6], %s23
      %s26 = sshll.u32 [#allocation5], 4
      %s27 = int_to_ptr.vmem [resolvable:$true] %s26
      %29 = dma.hbm_to_vmem [thread:$0]  %s1, 128, %s27, [#allocation6]
    $region9: #{tpu_custom_call.1} parent=1 // pred_fallthru
      _
    // Predicated region
    $region10: #{tpu_custom_call.1} parent=1 // pred_check
      _
    $region11: #{tpu_custom_call.1} parent=1 // pred_check_branch
      %31 = sbr.rel (0) target = $region13
    $region12: #{tpu_custom_call.1} parent=1 // pred_region
      %32 = dma.done [#allocation3], 128
    $region13: #{tpu_custom_call.1} parent=1 // pred_fallthru
      _
    // Predicated region
    $region14: #{tpu_custom_call.1} parent=1 // pred_check
      _
    $region15: #{tpu_custom_call.1} parent=1 // pred_check_branch
      %34 = sbr.rel (0) target = $region17
    $region16: #{tpu_custom_call.1} parent=1 // pred_region
      %35 = dma.done [#allocation6], 128
    $region17: #{tpu_custom_call.1} parent=1 // pred_fallthru
      _
    %v36 = vld [vmem:[#allocation5] sm:$0xff]
    %v37 = vld [vmem:[#allocation2] sm:$0xff]
    %v38 = vadd.f32 %v37, %v36
    %v39 = vmax.f32 %v38, 0.0
    %v40 = vmin.f32 %v39, 4.0
    %v41 = vround.ne.pseudo %v40
    %v42 = vmul.f32 %v41, 0.25
    %vm43 = vcmask 261120
    %44 = vst.msk [vmem:[#allocation7] sm:$0xff] %vm43, %v42
    %v45 = vld [vmem:[#allocation2] sm:$0xff]
    %47 = vrot.lane.b32.xlu0 %v36, 32
    %v48 = vpop.permute.xlu0 %47
    %v50 = vadd.f32 %v45, %v48
    %v51 = vmax.f32 %v50, 0.0
    %v52 = vmin.f32 %v51, 4.0
    %v53 = vround.ne.pseudo %v52
    %v54 = vmul.f32 %v53, 0.25
    %vm55 = vcmask 523520
    %56 = vst.msk [vmem:[#allocation7] sm:$0xff] %vm55, %v54
    // Predicated region
    $region18: #{tpu_custom_call.1} parent=1 // pred_check
      _
    $region19: #{tpu_custom_call.1} parent=1 // pred_check_branch
      %58 = sbr.rel (0) target = $region21
    $region20: #{tpu_custom_call.1} parent=1 // pred_region
      %s60 = ssub.s32 128, 128
      %61 = vsyncadd [#allocation4], %s60
      %s63 = sshll.u32 [#allocation7], 4
      %s64 = int_to_ptr.vmem [resolvable:$true] %s63
      %66 = dma.vmem_to_hbm [thread:$0]  %s64, 128, %s2, [#allocation4]
    $region21: #{tpu_custom_call.1} parent=1 // pred_fallthru
      _
    // Predicated region
    $region22: #{tpu_custom_call.1} parent=1 // pred_check
      _
    $region23: #{tpu_custom_call.1} parent=1 // pred_check_branch
      %68 = sbr.rel (0) target = $region25
    $region24: #{tpu_custom_call.1} parent=1 // pred_region
      %69 = dma.done [#allocation4], 128
    $region25: #{tpu_custom_call.1} parent=1 // pred_fallthru
      _
    %70 = vsyncpa [#allocation3], 1
    %71 = vsyncpa [#allocation6], 1
    %72 = vsyncpa [#allocation4], 1

</llo_original>
